<compile_context>
chip_gen: v6e
topology: v6e:2x2x1
jax: 0.10.0
libtpu: 0.0.40
codegen_flags: <defaults>
</compile_context>

<pallas_src>
import functools
import math

import jax
import jax.numpy as jnp
from jax import lax
from jax.experimental import pallas as pl
from jax.experimental.pallas import tpu as pltpu

_COMPUTE_DTYPE = jnp.bfloat16


# ------------------------------ Pallas kernel --------------------------------

def _conv3x3_relu_ps_kernel(x_ref, m_ref, b_ref, o_ref, xp_ref):
    # x_ref : (Bt, H, W*Cin)        Bt NHWC images, (W, Cin) flattened onto lanes
    # m_ref : (3*W*Cin, W*Cout)     banded-Toeplitz slab; rows = (ky, w_in, ci),
    #                               cols = (i, w_out, j, c)  (pixel-shuffle order)
    # b_ref : (1, W*Cout)           f32 bias columns, same (i, w_out, j, c) order
    # o_ref : (Bt, H, W*Cout)       fused conv+ReLU+PixelShuffle rows (lane-dense)
    # xp_ref: (Bt, H+2, W*Cin)      VMEM scratch: per-image vertically padded rows
    bt, h, wcin = x_ref.shape
    wcout = o_ref.shape[2]

    # refresh the per-image vertical zero halo (2 rows, cheap) + image rows
    zero_row = jnp.zeros((bt, 1, wcin), xp_ref.dtype)
    xp_ref[:, 0:1, :] = zero_row
    xp_ref[:, h + 1:h + 2, :] = zero_row
    xp_ref[:, 1:h + 1, :] = x_ref[...]

    # three accumulated MXU dots (one per ky band); f32 accumulation
    acc = jnp.zeros((bt * h, wcout), jnp.float32)
    for dy in range(3):                              # static unroll
        lhs = xp_ref[:, dy:dy + h, :].reshape(bt * h, wcin)
        acc = acc + jnp.dot(lhs, m_ref[dy * wcin:(dy + 1) * wcin, :],
                            preferred_element_type=jnp.float32)

    acc = jnp.maximum(acc + b_ref[...], 0.0)         # bias + ReLU on f32 accumulator

    # single lane-dense store; pixel shuffle is already encoded in column order
    o_ref[...] = acc.reshape(bt, h, wcout).astype(o_ref.dtype)


# ------------------------------ helpers / wrapper ------------------------------

def _pick_batch_tile(n, h, target_rows=256):
    """Largest divisor of n with Bt*H <= target MXU rows, preferring >=2 grid steps."""
    divisors = [d for d in range(1, n + 1) if n % d == 0]
    fits = [d for d in divisors if d * h <= target_rows] or [1]
    bt = max(fits)
    if n // bt < 2:  # keep >=2 parallel steps when possible (v7x has 2 TCs/chip)
        smaller = [d for d in fits if n // d >= 2]
        if smaller:
            bt = max(smaller)
    return bt


def _build_layer_slabs(w_oihw, bias, W, r, compute_dtype):
    """Banded-Toeplitz weight slab + bias columns for one conv layer at width W.

    Built once per (layer, W) and cached; horizontal taps and horizontal zero
    padding are folded into the band structure.
    """
    Cout, Cin = w_oihw.shape[0], w_oihw.shape[1]
    C = Cout // (r * r)                              # channels after the shuffle

    # PyTorch conv-out channel ch = c*r*r + i*r + j  ->  reorder to (i, j, c)
    w_f32 = w_oihw.astype(jnp.float32)
    w_ijc = jnp.transpose(w_f32.reshape(C, r, r, Cin, 3, 3),
                          (1, 2, 0, 3, 4, 5))        # (i, j, c, ci, ky, kx)
    dx = jnp.arange(3)[:, None, None]
    w_in = jnp.arange(W)[None, :, None]
    w_out = jnp.arange(W)[None, None, :]
    band = (w_in == w_out + dx - 1).astype(jnp.float32)   # (kx, W_in, W_out)
    m = jnp.einsum("bpq,ijceab->apeiqjc", band, w_ijc)    # (ky,Win,ci, i,Wout,j,c)
    m = m.reshape(3 * W * Cin, r * W * r * C).astype(compute_dtype)

    b_ijc = jnp.transpose(bias.astype(jnp.float32).reshape(C, r, r), (1, 2, 0))
    b_cols = jnp.broadcast_to(b_ijc[:, None, :, :],
                              (r, W, r, C)).reshape(1, r * W * r * C)
    return m, b_cols


def _conv3x3_relu_pixelshuffle_nhwc(x_nhwc, m, b_cols, r):
    """One layer: 3x3 conv (stride 1, pad 1) + ReLU + PixelShuffle(r), NHWC."""
    N, H, W, Cin = x_nhwc.shape
    wcin = W * Cin
    wcout = m.shape[1]                               # r * W * r * C
    C = wcout // (W * r * r)
    cdt = m.dtype

    bt = _pick_batch_tile(N, H)
    x2 = x_nhwc.astype(cdt).reshape(N, H, wcin)      # adjacent-dim reshape (free)

    out = pl.pallas_call(
        _conv3x3_relu_ps_kernel,
        out_shape=jax.ShapeDtypeStruct((N, H, wcout), cdt),
        grid_spec=pltpu.PrefetchScalarGridSpec(
            num_scalar_prefetch=0,
            grid=(N // bt,),                         # Bt images per step
            in_specs=[
                pl.BlockSpec((bt, H, wcin), lambda n: (n, 0, 0)),
                pl.BlockSpec((3 * wcin, wcout), lambda n: (0, 0)),
                pl.BlockSpec((1, wcout), lambda n: (0, 0)),
            ],
            out_specs=pl.BlockSpec((bt, H, wcout), lambda n: (n, 0, 0)),
            scratch_shapes=[pltpu.VMEM((bt, H + 2, wcin), cdt)],
        ),
        compiler_params=pltpu.CompilerParams(
            dimension_semantics=("parallel",)),
    )(x2, m, b_cols)

    # (N, H, r*W*r*C) -> pixel-shuffled NHWC; all adjacent-dim merges => no copy
    return out.reshape(N, H * r, W * r, C)


@functools.partial(jax.jit, static_argnames=("r",))
def _upsample_chain(x_nchw, layers, *, r):
    """Apply conv3x3+ReLU+PixelShuffle(r) once per layer slab. NCHW in/out."""
    if not layers:
        return x_nchw
    x = jnp.transpose(x_nchw, (0, 2, 3, 1)).astype(layers[0][0].dtype)  # once
    for (m, b_cols) in layers:
        x = _conv3x3_relu_pixelshuffle_nhwc(x, m, b_cols, r)
    return jnp.transpose(x, (0, 3, 1, 2)).astype(x_nchw.dtype)          # once


# ------------------------------ params / module -------------------------------

def _init_conv(key, cout, cin):
    # PyTorch Conv2d default init: uniform with bound = 1/sqrt(fan_in)
    bound = 1.0 / math.sqrt(cin * 3 * 3)
    kw, kb = jax.random.split(key)
    w = jax.random.uniform(kw, (cout, cin, 3, 3), jnp.float32, -bound, bound)
    b = jax.random.uniform(kb, (cout,), jnp.float32, -bound, bound)
    return w, b


def init_upsample_block_params(key, n_channels, scale):
    """Params for _UpsampleBlock(n_channels, scale) (group=1)."""
    params = []
    if scale in (2, 4, 8):
        r, steps = 2, int(math.log(scale, 2))
    elif scale == 3:
        r, steps = 3, 1
    else:
        return {"r": 1, "convs": [], "_slab_cache": {}}
    for _ in range(steps):
        key, sub = jax.random.split(key)
        params.append(_init_conv(sub, r * r * n_channels, n_channels))
    return {"r": r, "convs": params, "_slab_cache": {}}


def upsample_subblock_apply(block_params, x):
    convs = block_params["convs"]
    r = block_params["r"]
    if not convs:
        return x
    cache = block_params.setdefault("_slab_cache", {})
    W = int(x.shape[3])
    layers = []
    for idx, (w, b) in enumerate(convs):
        key = (idx, W)
        if key not in cache:                         # build slab once per (layer, W)
            cache[key] = _build_layer_slabs(w, b, W, r, _COMPUTE_DTYPE)
        layers.append(cache[key])
        W = W * r
    return _upsample_chain(x, tuple(layers), r=r)


class UpsampleBlock:
    """JAX/Pallas port of the PyTorch UpsampleBlock (group=1)."""

    def __init__(self, key, n_channels, scale, multi_scale):
        self.multi_scale = multi_scale
        if multi_scale:
            k2, k3, k4 = jax.random.split(key, 3)
            self.up2 = init_upsample_block_params(k2, n_channels, 2)
            self.up3 = init_upsample_block_params(k3, n_channels, 3)
            self.up4 = init_upsample_block_params(k4, n_channels, 4)
        else:
            self.up = init_upsample_block_params(key, n_channels, scale)

    def __call__(self, x, scale):
        if self.multi_scale:
            if scale == 2:
                return upsample_subblock_apply(self.up2, x)
            elif scale == 3:
                return upsample_subblock_apply(self.up3, x)
            elif scale == 4:
                return upsample_subblock_apply(self.up4, x)
            raise ValueError("scale must be 2, 3 or 4 in multi_scale mode")
        return upsample_subblock_apply(self.up, x)


# ------------------------------- reference ------------------------------------

def _conv3x3_relu_ref(x, w, b):
    y = lax.conv_general_dilated(
        x, w, window_strides=(1, 1), padding=((1, 1), (1, 1)),
        dimension_numbers=("NCHW", "OIHW", "NCHW"),
        precision=lax.Precision.HIGHEST)
    return jnp.maximum(y + b[None, :, None, None], 0.0)


def pixel_shuffle_nchw_ref(x, r):
    """torch.nn.PixelShuffle semantics (NCHW)."""
    N, C, H, W = x.shape
    c = C // (r * r)
    x = x.reshape(N, c, r, r, H, W)
    x = jnp.transpose(x, (0, 1, 4, 2, 5, 3))
    return x.reshape(N, c, H * r, W * r)


# --------------------------------- main ----------------------------------------

if __name__ == "__main__":
    key = jax.random.PRNGKey(0)
    k_param, k_x = jax.random.split(key)

    n_channels, scale = 4, 2
    x = jax.random.normal(k_x, (2, n_channels, 16, 16), jnp.float32)

    block = UpsampleBlock(k_param, n_channels, scale=scale, multi_scale=False)
    out = jax.block_until_ready(block(x, scale))

    assert out.shape == (2, n_channels, 16 * scale, 16 * scale), out.shape

    # sanity-check against a pure-JAX f32 reference (kernel feeds bf16 to the
    # MXU with f32 accumulation, so tolerances are bf16-level)
    ref = x
    for (w, b) in block.up["convs"]:
        ref = _conv3x3_relu_ref(ref, w, b)
        ref = pixel_shuffle_nchw_ref(ref, block.up["r"])
    max_err = float(jnp.max(jnp.abs(out - ref)))
    assert jnp.allclose(out, ref, rtol=2e-2, atol=2e-2), f"mismatch: {max_err}"

    print("KERNEL_OK")
</pallas_src>

<mosaic_0001>
module attributes {stable_mosaic.version = 11 : i64} {
  func.func @_conv3x3_relu_ps_kernel(%arg0: i32, %arg1: memref<1x16x64xbf16, #tpu.memory_space<vmem>>, %arg2: memref<192x256xbf16, #tpu.memory_space<vmem>>, %arg3: memref<1x256xf32, #tpu.memory_space<vmem>>, %arg4: memref<1x16x256xbf16, #tpu.memory_space<vmem>>, %arg5: memref<1x18x64xbf16, #tpu.memory_space<vmem>>) attributes {dimension_semantics = [#tpu.dimension_semantics<parallel>], iteration_bounds = array<i64: 2>, scalar_prefetch = 0 : i64, scratch_operands = 1 : i64, tpu.core_type = #tpu.core_type<tc>, window_params = [{transform_indices = @transform_0, window_bounds = array<i64: 1, 16, 64>}, {pipeline_mode = #tpu.pipeline_mode<synchronous>, transform_indices = @transform_1, window_bounds = array<i64: 192, 256>}, {pipeline_mode = #tpu.pipeline_mode<synchronous>, transform_indices = @transform_2, window_bounds = array<i64: 1, 256>}, {transform_indices = @transform_3, window_bounds = array<i64: 1, 16, 256>}]} {
    %cst = arith.constant 0.000000e+00 : bf16
    %0 = vector.broadcast %cst : bf16 to vector<1x1x64xbf16>
    %c0 = arith.constant 0 : index
    %c0_0 = arith.constant 0 : index
    %c0_1 = arith.constant 0 : index
    %1 = vector.load %arg5[%c0, %c0_0, %c0_1] : memref<1x18x64xbf16, #tpu.memory_space<vmem>>, vector<1x1x64xbf16>
    tpu.vector_store %arg5[%c0, %c0_0, %c0_1], %0 {strides = array<i32>} : memref<1x18x64xbf16, #tpu.memory_space<vmem>>, vector<1x1x64xbf16>,
    %c0_2 = arith.constant 0 : index
    %c17 = arith.constant 17 : index
    %c0_3 = arith.constant 0 : index
    %2 = vector.load %arg5[%c0_2, %c17, %c0_3] : memref<1x18x64xbf16, #tpu.memory_space<vmem>>, vector<1x1x64xbf16>
    tpu.vector_store %arg5[%c0_2, %c17, %c0_3], %0 {strides = array<i32>} : memref<1x18x64xbf16, #tpu.memory_space<vmem>>, vector<1x1x64xbf16>,
    %c0_4 = arith.constant 0 : index
    %c0_5 = arith.constant 0 : index
    %c0_6 = arith.constant 0 : index
    %3 = vector.load %arg1[%c0_4, %c0_5, %c0_6] : memref<1x16x64xbf16, #tpu.memory_space<vmem>>, vector<1x16x64xbf16>
    %c0_7 = arith.constant 0 : index
    %c1 = arith.constant 1 : index
    %c0_8 = arith.constant 0 : index
    %4 = vector.load %arg5[%c0_7, %c1, %c0_8] : memref<1x18x64xbf16, #tpu.memory_space<vmem>>, vector<1x16x64xbf16>
    tpu.vector_store %arg5[%c0_7, %c1, %c0_8], %3 {strides = array<i32>} : memref<1x18x64xbf16, #tpu.memory_space<vmem>>, vector<1x16x64xbf16>,
    %cst_9 = arith.constant 0.000000e+00 : f32
    %5 = vector.broadcast %cst_9 : f32 to vector<16x256xf32>
    %c0_10 = arith.constant 0 : index
    %c0_11 = arith.constant 0 : index
    %c0_12 = arith.constant 0 : index
    %6 = vector.load %arg5[%c0_10, %c0_11, %c0_12] : memref<1x18x64xbf16, #tpu.memory_space<vmem>>, vector<1x16x64xbf16>
    %7 = vector.shape_cast %6 : vector<1x16x64xbf16> to vector<16x64xbf16>
    %c0_13 = arith.constant 0 : index
    %c0_14 = arith.constant 0 : index
    %8 = vector.load %arg2[%c0_13, %c0_14] : memref<192x256xbf16, #tpu.memory_space<vmem>>, vector<64x256xbf16>
    %cst_15 = arith.constant dense<0.000000e+00> : vector<16x256xf32>
    %9 = tpu.matmul %7, %8, %cst_15 {dimension_numbers = #tpu.dot_dimension_numbers<[1], [0], [0], [1], [0, 0, 1, 1], [], []>} : vector<16x64xbf16>, vector<64x256xbf16>, vector<16x256xf32> -> vector<16x256xf32>
    %10 = arith.addf %5, %9 : vector<16x256xf32>
    %c0_16 = arith.constant 0 : index
    %c1_17 = arith.constant 1 : index
    %c0_18 = arith.constant 0 : index
    %11 = vector.load %arg5[%c0_16, %c1_17, %c0_18] : memref<1x18x64xbf16, #tpu.memory_space<vmem>>, vector<1x16x64xbf16>
    %12 = vector.shape_cast %11 : vector<1x16x64xbf16> to vector<16x64xbf16>
    %c64 = arith.constant 64 : index
    %c0_19 = arith.constant 0 : index
    %13 = vector.load %arg2[%c64, %c0_19] : memref<192x256xbf16, #tpu.memory_space<vmem>>, vector<64x256xbf16>
    %cst_20 = arith.constant dense<0.000000e+00> : vector<16x256xf32>
    %14 = tpu.matmul %12, %13, %cst_20 {dimension_numbers = #tpu.dot_dimension_numbers<[1], [0], [0], [1], [0, 0, 1, 1], [], []>} : vector<16x64xbf16>, vector<64x256xbf16>, vector<16x256xf32> -> vector<16x256xf32>
    %15 = arith.addf %10, %14 : vector<16x256xf32>
    %c0_21 = arith.constant 0 : index
    %c2 = arith.constant 2 : index
    %c0_22 = arith.constant 0 : index
    %16 = vector.load %arg5[%c0_21, %c2, %c0_22] : memref<1x18x64xbf16, #tpu.memory_space<vmem>>, vector<1x16x64xbf16>
    %17 = vector.shape_cast %16 : vector<1x16x64xbf16> to vector<16x64xbf16>
    %c128 = arith.constant 128 : index
    %c0_23 = arith.constant 0 : index
    %18 = vector.load %arg2[%c128, %c0_23] : memref<192x256xbf16, #tpu.memory_space<vmem>>, vector<64x256xbf16>
    %cst_24 = arith.constant dense<0.000000e+00> : vector<16x256xf32>
    %19 = tpu.matmul %17, %18, %cst_24 {dimension_numbers = #tpu.dot_dimension_numbers<[1], [0], [0], [1], [0, 0, 1, 1], [], []>} : vector<16x64xbf16>, vector<64x256xbf16>, vector<16x256xf32> -> vector<16x256xf32>
    %20 = arith.addf %15, %19 : vector<16x256xf32>
    %c0_25 = arith.constant 0 : index
    %c0_26 = arith.constant 0 : index
    %21 = vector.load %arg3[%c0_25, %c0_26] : memref<1x256xf32, #tpu.memory_space<vmem>>, vector<1x256xf32>
    %22 = vector.broadcast %21 : vector<1x256xf32> to vector<16x256xf32>
    %23 = arith.addf %20, %22 : vector<16x256xf32>
    %cst_27 = arith.constant 0.000000e+00 : f32
    %24 = vector.broadcast %cst_27 : f32 to vector<16x256xf32>
    %25 = arith.maximumf %23, %24 : vector<16x256xf32>
    %26 = vector.shape_cast %25 : vector<16x256xf32> to vector<1x16x256xf32>
    %27 = arith.truncf %26 : vector<1x16x256xf32> to vector<1x16x256xbf16>
    %c0_28 = arith.constant 0 : index
    %c0_29 = arith.constant 0 : index
    %c0_30 = arith.constant 0 : index
    %28 = vector.load %arg4[%c0_28, %c0_29, %c0_30] : memref<1x16x256xbf16, #tpu.memory_space<vmem>>, vector<1x16x256xbf16>
    tpu.vector_store %arg4[%c0_28, %c0_29, %c0_30], %27 {strides = array<i32>} : memref<1x16x256xbf16, #tpu.memory_space<vmem>>, vector<1x16x256xbf16>,
    return
  }
  func.func @transform_0(%arg0: i32) -> (i32, i32, i32) {
    %c0_i32 = arith.constant 0 : i32
    %c0_i32_0 = arith.constant 0 : i32
    %c0_i32_1 = arith.constant 0 : i32
    return %arg0, %c0_i32, %c0_i32_0 : i32, i32, i32
  }
  func.func @transform_1(%arg0: i32) -> (i32, i32) {
    %c0_i32 = arith.constant 0 : i32
    %c0_i32_0 = arith.constant 0 : i32
    %c0_i32_1 = arith.constant 0 : i32
    return %c0_i32, %c0_i32_0 : i32, i32
  }
  func.func @transform_2(%arg0: i32) -> (i32, i32) {
    %c0_i32 = arith.constant 0 : i32
    %c0_i32_0 = arith.constant 0 : i32
    %c0_i32_1 = arith.constant 0 : i32
    return %c0_i32, %c0_i32_0 : i32, i32
  }
  func.func @transform_3(%arg0: i32) -> (i32, i32, i32) {
    %c0_i32 = arith.constant 0 : i32
    %c0_i32_0 = arith.constant 0 : i32
    %c0_i32_1 = arith.constant 0 : i32
    return %arg0, %c0_i32, %c0_i32_0 : i32, i32, i32
  }
}

</mosaic_0001>

<llo_original>
// kernel: _upsample_chain.1
$region0: #{_upsample_chain.1}
  #allocation0 [shape = 'u32[]', space=smem, size = 0x4, offset = 0x4, fixed_abs, tag = 'smem constant byte address 0x4 - core index']
  #allocation1 [shape = 'u32[144,128]{1,0:T(1,128)}', space=vmem, size = 0x12000, scoped, tag = 'internal scratch']
  #allocation2 [shape = 'bf16[1,18,64]{2,1,0:T(8,128)(2,1)}', space=vmem, size = 0x1800, scoped, tag = 'scratch operand']
  %s0 = inlined_call_operand.vmem [shape: bf16[2,16,64], index: 0, kind: input, shape index: {}]
  %s1 = inlined_call_operand.vmem [shape: bf16[192,256], index: 1, kind: input, shape index: {}]
  %s2 = inlined_call_operand.vmem [shape: f32[1,256], index: 2, kind: input, shape index: {}]
  %s3 = inlined_call_operand.vmem [shape: bf16[2,16,256], index: 3, kind: output, shape index: {}]
  %s4 = sld [smem:[#allocation0]]
  $region45: #{_upsample_chain.1} parent=0
    _
  %s6 = ssub.s32 1, %s4
  %s7 = scalar_select 0, %s6, %s4
  loop: start=0, step=1, limit=4
  $region2: #{_upsample_chain.1} parent=0 // loop_pre_header
    _
  $region3: #{_upsample_chain.1} parent=0 // loop_header
    %s9 = sphi 0, %s13
    %p10 = scmp.ge.s32.totalorder %s9, 4
    %s19 = sphi 0, %s21
    %s22 = sphi 0, %s19
    %s23 = sphi 0, %s22
    %s39 = sphi 0, %s23
    %s43 = sphi 0, %s43
    %s45 = sphi 0, %s43
    %s46 = sphi 0, %s45
    %s60 = sphi 0, %s46
    %s64 = sphi 0, %s64
    %s66 = sphi 0, %s64
    %s67 = sphi 0, %s66
    %s81 = sphi 0, %s67
    %s87 = sphi 0, %s89
    %s90 = sphi 0, %s87
    %s91 = sphi 0, %s90
    %s107 = sphi 0, %s91
  $region4: #{_upsample_chain.1} parent=0 // loop_header_branch
    %12 = sbr.rel (%p10) target = $region8
  $region5: #{_upsample_chain.1} parent=0 // loop_body
    %s14 = ssub.s32 %s9, 1
    %s15 = ssub.s32 %s9, 2
    %s16 = sadd.s32 %s9, 1
    %s17 = ssub.s32 %s9, %s16
    %p18 = scmp.eq.s32.totalorder %s17, 0
    %s20 = sadd.s32 %s19, 1
    %s21 = scalar_select %p18, %s19, %s20
    %p24 = pneg %p18
    %p25 = scmp.eq.s32.totalorder %s9, 1
    %p26 = por %p24, %p25
    %p27 = scmp.ne.s32.totalorder %s19, %s22
    %p28 = scmp.eq.s32.totalorder %s9, 0
    %p29 = por %p27, %p28
    %p30 = scmp.ne.s32.totalorder %s19, %s22
    %p31 = scmp.eq.s32.totalorder %s14, 1
    %p32 = por %p30, %p31
    %p33 = scmp.ne.s32.totalorder %s22, %s23
    %p34 = scmp.eq.s32.totalorder %s14, 0
    %p35 = por %p33, %p34
    %p36 = scmp.ne.s32.totalorder %s22, %s23
    %p37 = scmp.eq.s32.totalorder %s15, 1
    %p38 = por %p36, %p37
    %p40 = scmp.ne.s32.totalorder %s23, %s39
    %p41 = scmp.eq.s32.totalorder %s15, 0
    %p42 = por %p40, %p41
    %s44 = sadd.s32 %s43, 1
    %p47 = scmp.eq.s32.totalorder %s9, 1
    %p48 = scmp.ne.s32.totalorder %s43, %s45
    %p49 = scmp.eq.s32.totalorder %s9, 0
    %p50 = por %p48, %p49
    %p51 = scmp.ne.s32.totalorder %s43, %s45
    %p52 = scmp.eq.s32.totalorder %s14, 1
    %p53 = por %p51, %p52
    %p54 = scmp.ne.s32.totalorder %s45, %s46
    %p55 = scmp.eq.s32.totalorder %s14, 0
    %p56 = por %p54, %p55
    %p57 = scmp.ne.s32.totalorder %s45, %s46
    %p58 = scmp.eq.s32.totalorder %s15, 1
    %p59 = por %p57, %p58
    %p61 = scmp.ne.s32.totalorder %s46, %s60
    %p62 = scmp.eq.s32.totalorder %s15, 0
    %p63 = por %p61, %p62
    %s65 = sadd.s32 %s64, 1
    %p68 = scmp.eq.s32.totalorder %s9, 1
    %p69 = scmp.ne.s32.totalorder %s64, %s66
    %p70 = scmp.eq.s32.totalorder %s9, 0
    %p71 = por %p69, %p70
    %p72 = scmp.ne.s32.totalorder %s64, %s66
    %p73 = scmp.eq.s32.totalorder %s14, 1
    %p74 = por %p72, %p73
    %p75 = scmp.ne.s32.totalorder %s66, %s67
    %p76 = scmp.eq.s32.totalorder %s14, 0
    %p77 = por %p75, %p76
    %p78 = scmp.ne.s32.totalorder %s66, %s67
    %p79 = scmp.eq.s32.totalorder %s15, 1
    %p80 = por %p78, %p79
    %p82 = scmp.ne.s32.totalorder %s67, %s81
    %p83 = scmp.eq.s32.totalorder %s15, 0
    %p84 = por %p82, %p83
    %s85 = ssub.s32 %s9, %s16
    %p86 = scmp.eq.s32.totalorder %s85, 0
    %s88 = sadd.s32 %s87, 1
    %s89 = scalar_select %p86, %s87, %s88
    %p92 = pneg %p86
    %p93 = scmp.eq.s32.totalorder %s9, 1
    %p94 = por %p92, %p93
    %p95 = scmp.ne.s32.totalorder %s87, %s90
    %p96 = scmp.eq.s32.totalorder %s9, 0
    %p97 = por %p95, %p96
    %p98 = scmp.ne.s32.totalorder %s87, %s90
    %p99 = scmp.eq.s32.totalorder %s14, 1
    %p100 = por %p98, %p99
    %p101 = scmp.ne.s32.totalorder %s90, %s91
    %p102 = scmp.eq.s32.totalorder %s14, 0
    %p103 = por %p101, %p102
    %p104 = scmp.ne.s32.totalorder %s90, %s91
    %p105 = scmp.eq.s32.totalorder %s15, 1
    %p106 = por %p104, %p105
    %p108 = scmp.ne.s32.totalorder %s91, %s107
    %p109 = scmp.eq.s32.totalorder %s15, 0
    %p110 = por %p108, %p109
    %p111 = scmp.le.s32.totalorder 1, %s9
    %p112 = scmp.lt.s32.totalorder %s9, 3
    %p113 = pnand %p111, %p112
    %p114 = pneg %p113
    // Predicated region
    $region9: #{_upsample_chain.1} parent=5 // pred_check
      _
    $region10: #{_upsample_chain.1} parent=5 // pred_check_branch
      %116 = sbr.rel (%p113) target = $region12
    $region11: #{_upsample_chain.1} parent=5 // pred_region
      %s117 = ssub.s32 %s9, 1
      // Predicated region
      $region13: #{_upsample_chain.1} parent=11 // pred_check
        %p118 = pneg %p56
      $region14: #{_upsample_chain.1} parent=11 // pred_check_branch
        %120 = sbr.rel (%p118) target = $region16
      $region15: #{_upsample_chain.1} parent=11 // pred_region
        _
      $region16: #{_upsample_chain.1} parent=11 // pred_fallthru
        _
      // Predicated region
      $region17: #{_upsample_chain.1} parent=11 // pred_check
        %p121 = pneg %p77
      $region18: #{_upsample_chain.1} parent=11 // pred_check_branch
        %123 = sbr.rel (%p121) target = $region20
      $region19: #{_upsample_chain.1} parent=11 // pred_region
        _
      $region20: #{_upsample_chain.1} parent=11 // pred_fallthru
        _
    $region12: #{_upsample_chain.1} parent=5 // pred_fallthru
      _
    %p124 = scmp.lt.s32.totalorder %s9, 2
    // Predicated region
    $region21: #{_upsample_chain.1} parent=5 // pred_check
      %p125 = pneg %p124
    $region22: #{_upsample_chain.1} parent=5 // pred_check_branch
      %127 = sbr.rel (%p125) target = $region24
    $region23: #{_upsample_chain.1} parent=5 // pred_region
      // Predicated region
      $region25: #{_upsample_chain.1} parent=23 // pred_check
        %p128 = pneg %p29
      $region26: #{_upsample_chain.1} parent=23 // pred_check_branch
        %130 = sbr.rel (%p128) target = $region28
      $region27: #{_upsample_chain.1} parent=23 // pred_region
        %p131 = scmp.lt.s32.totalorder %s9, 1
        %s132 = scalar_select %p131, %s9, 1
        %s133 = smul.addr %s132, 2
        %s134 = smul.addr %s133, 4
        %s135 = scalar_lea.vmem %s0, %s134
      $region28: #{_upsample_chain.1} parent=23 // pred_fallthru
        _
    $region24: #{_upsample_chain.1} parent=5 // pred_fallthru
      _
    %p136 = scmp.le.s32.totalorder 1, %s9
    %p137 = scmp.lt.s32.totalorder %s9, 3
    %p138 = pnand %p136, %p137
    %p139 = pneg %p138
    // Predicated region
    $region29: #{_upsample_chain.1} parent=5 // pred_check
      _
    $region30: #{_upsample_chain.1} parent=5 // pred_check_branch
      %141 = sbr.rel (%p138) target = $region32
    $region31: #{_upsample_chain.1} parent=5 // pred_region
      %s142 = ssub.s32 %s9, 1
      %p143 = scmp.lt.s32.totalorder %s14, 1
      %s144 = scalar_select %p143, %s14, 1
      %s145 = smul.addr %s144, 2
      %s146 = smul.addr %s145, 4
      %s147 = scalar_lea.vmem %s0, %s146
      %p148 = pneg %p35
      %p149 = pneg %p32
      %p150 = pneg %p56
      %p151 = pneg %p53
      %p152 = pneg %p77
      %p153 = pneg %p74
      %p154 = pneg %p103
      %p155 = pneg %p100
      %p156 = scmp.lt.s32.totalorder %s14, 1
      %s157 = scalar_select %p156, %s14, 1
      %s158 = smul.addr %s157, 4
      %s159 = smul.addr %s158, 4
      %s160 = scalar_lea.vmem %s3, %s159
      %p161 = scmp.lt.s32.totalorder %s14, 1
      %s162 = scalar_select %p161, %s14, 1
      %s163 = smul.addr %s162, 2
      %s164 = smul.addr %s163, 4
      %s165 = scalar_lea.vmem %s0, %s164
      %p166 = scmp.lt.s32.totalorder %s14, 1
      %s167 = scalar_select %p166, %s14, 1
      %s168 = smul.addr %s167, 4
      %s169 = smul.addr %s168, 4
      %s170 = scalar_lea.vmem %s3, %s169
      %vm172 = vcmask 516096
      %vm173 = vsmask.f32 256
      %vm174 = vmand %vm172, %vm173
      %v175 = vld [vmem:[#allocation2] sm:$0x1]
      %v176 = vsel %vm174, 0, %v175
      %177 = vst [vmem:[#allocation2] sm:$0x1] %v176
      %vm178 = vsmask.f32 7938
      %vm179 = vmand %vm172, %vm178
      %v180 = vld [vmem:[#allocation2 + $0x8] sm:$0x1]
      %v181 = vsel %vm179, 0, %v180
      %182 = vst [vmem:[#allocation2 + $0x8] sm:$0x1] %v181
      %v183 = vld [vmem:[%s165] sm:$0xf]
      %v184 = vld [vmem:[%s165 + $0x4] sm:$0xf]
      %vm185 = vsmask.f32 4368
      %vm186 = vmor %vm173, %vm185
      %v188 = vshrl.u32 %v183, 16
      %v190 = vrot.slane %v188, 7
      %v191 = vshll.u32 %v183, 16
      %v193 = vor.u32 %v190, %v191
      %v194 = vrot.slane %v190, 4
      %v196 = vshrl.u32 %v184, 16
      %v198 = vrot.slane %v196, 7
      %v199 = vshll.u32 %v184, 16
      %v201 = vor.u32 %v198, %v199
      %v202 = vsel %vm186, %v194, %v201
      %v203 = vrot.slane %v198, 4
      %vm207 = vcmask 519168
      %vm208 = vmand %vm207, %vm178
      %v209 = vld [vmem:[#allocation2] sm:$0xf]
      %v210 = vsel %vm208, %v193, %v209
      %211 = vst [vmem:[#allocation2] sm:$0xf] %v210
      %vm212 = vcmask 519168
      %213 = vst.msk [vmem:[#allocation2 + $0x4] sm:$0xf] %vm212, %v202
      %v214 = vld [vmem:[#allocation2 + $0x8] sm:$0x1]
      %v215 = vsel %vm174, %v203, %v214
      %216 = vst [vmem:[#allocation2 + $0x8] sm:$0x1] %v215
      %v217 = vld [vmem:[#allocation2] sm:$0xf]
      %v218 = vld [vmem:[#allocation2 + $0x4] sm:$0xf]
      %v219 = vld [vmem:[%s1] sm:$0xff]
      %v220 = vld [vmem:[%s1 + $0x8] sm:$0xff]
      %v221 = vld [vmem:[%s1 + $0x10] sm:$0xff]
      %v222 = vld [vmem:[%s1 + $0x18] sm:$0xff]
      %v223 = vld [vmem:[%s1 + $0x20] sm:$0xff]
      %v224 = vld [vmem:[%s1 + $0x28] sm:$0xff]
      %v225 = vld [vmem:[%s1 + $0x30] sm:$0xff]
      %v226 = vld [vmem:[%s1 + $0x38] sm:$0xff]
      %v227 = vld [vmem:[#allocation2 + $0x8] sm:$0x1]
      %v228 = vld [vmem:[%s1 + $0x40] sm:$0xff]
      %v229 = vld [vmem:[%s1 + $0x48] sm:$0xff]
      %v230 = vld [vmem:[%s1 + $0x50] sm:$0xff]
      %v231 = vld [vmem:[%s1 + $0x58] sm:$0xff]
      %v232 = vld [vmem:[%s1 + $0x60] sm:$0xff]
      %v233 = vld [vmem:[%s1 + $0x68] sm:$0xff]
      %v234 = vld [vmem:[%s1 + $0x70] sm:$0xff]
      %v235 = vld [vmem:[%s1 + $0x78] sm:$0xff]
      %v239 = vunpack.c.l.b16 %v217
      %v240 = vunpack.c.l.b16 %v218
      %v241 = vunpack.c.l.b16 %v227
      %v242 = vpack.c.b16 %v240, %v239
      %v243 = vpack.c.b16 %v241, %v241
      %vm244 = vsmask.f32 7424
      %v246 = vshrl.u32 %v242, 16
      %v248 = vshll.u32 %v242, 16
      %v250 = vrot.slane %v248, 1
      %v251 = vor.u32 %v246, %v250
      %v253 = vshll.u32 %v243, 16
      %v255 = vrot.slane %v253, 1
      %v256 = vsel %vm244, %v251, %v255
      %v265 = vunpack.c.l.b16 %v228
      %v266 = vunpack.c.h.b16 %v228
      %v267 = vunpack.c.l.b16 %v229
      %v268 = vunpack.c.h.b16 %v229
      %v269 = vunpack.c.l.b16 %v230
      %v270 = vunpack.c.h.b16 %v230
      %v271 = vunpack.c.l.b16 %v231
      %v272 = vunpack.c.h.b16 %v231
      %v273 = vunpack.c.l.b16 %v232
      %v274 = vunpack.c.h.b16 %v232
      %v275 = vunpack.c.l.b16 %v233
      %v276 = vunpack.c.h.b16 %v233
      %v277 = vunpack.c.l.b16 %v234
      %v278 = vunpack.c.h.b16 %v234
      %v279 = vunpack.c.l.b16 %v235
      %v280 = vunpack.c.h.b16 %v235
      %v281 = vpack.c.b16 %v267, %v265
      %v282 = vpack.c.b16 %v268, %v266
      %v283 = vpack.c.b16 %v271, %v269
      %v284 = vpack.c.b16 %v272, %v270
      %v285 = vpack.c.b16 %v275, %v273
      %v286 = vpack.c.b16 %v276, %v274
      %v287 = vpack.c.b16 %v279, %v277
      %v288 = vpack.c.b16 %v280, %v278
      %vm297 = vcmask 523264
      %v299 = vsel %vm297, %v256, 0
      %301 = vmatprep.subr.bf16.mxu0 0
      %302 = vmatpush1.bf16.msra.mxu0 0
      %303 = vmatprep.subr.bf16.mxu0 0
      %304 = vmatpush1.bf16.msra.mxu0 0
      %305 = vmatprep.subr.bf16.mxu0 0
      %306 = vmatpush1.bf16.msra.mxu0 0
      %307 = vmatprep.subr.bf16.mxu0 0
      %308 = vmatpush1.bf16.msra.mxu0 0
      %309 = vmatprep.subr.bf16.mxu0 %v288
      %310 = vmatpush1.bf16.msra.mxu0 %v287
      %311 = vmatprep.subr.bf16.mxu0 %v286
      %312 = vmatpush1.bf16.msra.mxu0 %v285
      %313 = vmatprep.subr.bf16.mxu0 %v284
      %314 = vmatpush1.bf16.msra.mxu0 %v283
      %315 = vmatprep.subr.bf16.mxu0 %v282
      %316 = vmatpush1.bf16.msra.mxu0 %v281
      %317 = vmatprep.subr.bf16.mxu0 0
      %318 = vmatpush2.bf16.msra.mxu0 0
      %319 = vmatprep.subr.bf16.mxu0 0
      %320 = vmatpush2.bf16.msra.mxu0 0
      %321 = vmatprep.subr.bf16.mxu0 0
      %322 = vmatpush2.bf16.msra.mxu0 0
      %323 = vmatprep.subr.bf16.mxu0 0
      %324 = vmatpush2.bf16.msra.mxu0 0
      %325 = vmatprep.subr.bf16.mxu0 0
      %326 = vmatpush2.bf16.msra.mxu0 0
      %327 = vmatprep.subr.bf16.mxu0 0
      %328 = vmatpush2.bf16.msra.mxu0 0
      %329 = vmatprep.subr.bf16.mxu0 0
      %330 = vmatpush2.bf16.msra.mxu0 0
      %331 = vmatprep.subr.bf16.mxu0 0
      %332 = vmatpush2.bf16.msra.mxu0 0
      %333 = vmatprep.mubr.bf16.mxu0 0
      %334 = vmatmul.mubr.bf16.gmra.mxu0 %v299
      %v335 = vpop.f32.mrf.mxu0
      %v336 = vadd.f32 0.0, %v335
      %v337 = vpop.f32.mrf.mxu0
      %v338 = vadd.f32 0.0, %v337
      %v339 = vpop.f32.mrf.mxu0
      %v340 = vadd.f32 0.0, %v339
      %v341 = vpop.f32.mrf.mxu0
      %v342 = vadd.f32 0.0, %v341
      %343 = vdwg.mxu0
      %v352 = vunpack.c.l.b16 %v219
      %v353 = vunpack.c.h.b16 %v219
      %v354 = vunpack.c.l.b16 %v220
      %v355 = vunpack.c.h.b16 %v220
      %v356 = vunpack.c.l.b16 %v221
      %v357 = vunpack.c.h.b16 %v221
      %v358 = vunpack.c.l.b16 %v222
      %v359 = vunpack.c.h.b16 %v222
      %v360 = vunpack.c.l.b16 %v223
      %v361 = vunpack.c.h.b16 %v223
      %v362 = vunpack.c.l.b16 %v224
      %v363 = vunpack.c.h.b16 %v224
      %v364 = vunpack.c.l.b16 %v225
      %v365 = vunpack.c.h.b16 %v225
      %v366 = vunpack.c.l.b16 %v226
      %v367 = vunpack.c.h.b16 %v226
      %v368 = vpack.c.b16 %v354, %v352
      %v369 = vpack.c.b16 %v355, %v353
      %v370 = vpack.c.b16 %v358, %v356
      %v371 = vpack.c.b16 %v359, %v357
      %v372 = vpack.c.b16 %v362, %v360
      %v373 = vpack.c.b16 %v363, %v361
      %v374 = vpack.c.b16 %v366, %v364
      %v375 = vpack.c.b16 %v367, %v365
      %v384 = vsel %vm297, %v242, 0
      %386 = vmatprep.subr.bf16.mxu0 0
      %387 = vmatpush1.bf16.msra.mxu0 0
      %388 = vmatprep.subr.bf16.mxu0 0
      %389 = vmatpush1.bf16.msra.mxu0 0
      %390 = vmatprep.subr.bf16.mxu0 0
      %391 = vmatpush1.bf16.msra.mxu0 0
      %392 = vmatprep.subr.bf16.mxu0 0
      %393 = vmatpush1.bf16.msra.mxu0 0
      %394 = vmatprep.subr.bf16.mxu0 %v375
      %395 = vmatpush1.bf16.msra.mxu0 %v374
      %396 = vmatprep.subr.bf16.mxu0 %v373
      %397 = vmatpush1.bf16.msra.mxu0 %v372
      %398 = vmatprep.subr.bf16.mxu0 %v371
      %399 = vmatpush1.bf16.msra.mxu0 %v370
      %400 = vmatprep.subr.bf16.mxu0 %v369
      %401 = vmatpush1.bf16.msra.mxu0 %v368
      %402 = vmatprep.subr.bf16.mxu0 0
      %403 = vmatpush2.bf16.msra.mxu0 0
      %404 = vmatprep.subr.bf16.mxu0 0
      %405 = vmatpush2.bf16.msra.mxu0 0
      %406 = vmatprep.subr.bf16.mxu0 0
      %407 = vmatpush2.bf16.msra.mxu0 0
      %408 = vmatprep.subr.bf16.mxu0 0
      %409 = vmatpush2.bf16.msra.mxu0 0
      %410 = vmatprep.subr.bf16.mxu0 0
      %411 = vmatpush2.bf16.msra.mxu0 0
      %412 = vmatprep.subr.bf16.mxu0 0
      %413 = vmatpush2.bf16.msra.mxu0 0
      %414 = vmatprep.subr.bf16.mxu0 0
      %415 = vmatpush2.bf16.msra.mxu0 0
      %416 = vmatprep.subr.bf16.mxu0 0
      %417 = vmatpush2.bf16.msra.mxu0 0
      %418 = vmatprep.mubr.bf16.mxu0 0
      %419 = vmatmul.mubr.bf16.gmra.mxu0 %v384
      %v420 = vpop.f32.mrf.mxu0
      %v421 = vadd.f32 %v336, %v420
      %v422 = vpop.f32.mrf.mxu0
      %v423 = vadd.f32 %v338, %v422
      %v424 = vpop.f32.mrf.mxu0
      %v425 = vadd.f32 %v340, %v424
      %v426 = vpop.f32.mrf.mxu0
      %v427 = vadd.f32 %v342, %v426
      %428 = vdwg.mxu0
      %v429 = vld [vmem:[#allocation2] sm:$0xe]
      %v430 = vld [vmem:[%s1 + $0x80] sm:$0xff]
      %v431 = vld [vmem:[%s1 + $0x88] sm:$0xff]
      %v432 = vld [vmem:[%s1 + $0x90] sm:$0xff]
      %v433 = vld [vmem:[%s1 + $0x98] sm:$0xff]
      %v434 = vld [vmem:[%s1 + $0xa0] sm:$0xff]
      %v435 = vld [vmem:[%s1 + $0xa8] sm:$0xff]
      %v436 = vld [vmem:[%s1 + $0xb0] sm:$0xff]
      %v437 = vld [vmem:[%s1 + $0xb8] sm:$0xff]
      %v439 = vunpack.c.l.b16 %v429
      %v440 = vpack.c.b16 %v240, %v439
      %vm441 = vcmask 1046528
      %v442 = vrot.slane %v440, 1
      %v443 = vrot.slane %v243, 1
      %v444 = vsel %vm441, %v442, %v443
      %v453 = vunpack.c.l.b16 %v430
      %v454 = vunpack.c.h.b16 %v430
      %v455 = vunpack.c.l.b16 %v431
      %v456 = vunpack.c.h.b16 %v431
      %v457 = vunpack.c.l.b16 %v432
      %v458 = vunpack.c.h.b16 %v432
      %v459 = vunpack.c.l.b16 %v433
      %v460 = vunpack.c.h.b16 %v433
      %v461 = vunpack.c.l.b16 %v434
      %v462 = vunpack.c.h.b16 %v434
      %v463 = vunpack.c.l.b16 %v435
      %v464 = vunpack.c.h.b16 %v435
      %v465 = vunpack.c.l.b16 %v436
      %v466 = vunpack.c.h.b16 %v436
      %v467 = vunpack.c.l.b16 %v437
      %v468 = vunpack.c.h.b16 %v437
      %v469 = vpack.c.b16 %v455, %v453
      %v470 = vpack.c.b16 %v456, %v454
      %v471 = vpack.c.b16 %v459, %v457
      %v472 = vpack.c.b16 %v460, %v458
      %v473 = vpack.c.b16 %v463, %v461
      %v474 = vpack.c.b16 %v464, %v462
      %v475 = vpack.c.b16 %v467, %v465
      %v476 = vpack.c.b16 %v468, %v466
      %v486 = vsel %vm297, %v444, 0
      %488 = vmatprep.subr.bf16.mxu0 0
      %489 = vmatpush1.bf16.msra.mxu0 0
      %490 = vmatprep.subr.bf16.mxu0 0
      %491 = vmatpush1.bf16.msra.mxu0 0
      %492 = vmatprep.subr.bf16.mxu0 0
      %493 = vmatpush1.bf16.msra.mxu0 0
      %494 = vmatprep.subr.bf16.mxu0 0
      %495 = vmatpush1.bf16.msra.mxu0 0
      %496 = vmatprep.subr.bf16.mxu0 %v476
      %497 = vmatpush1.bf16.msra.mxu0 %v475
      %498 = vmatprep.subr.bf16.mxu0 %v474
      %499 = vmatpush1.bf16.msra.mxu0 %v473
      %500 = vmatprep.subr.bf16.mxu0 %v472
      %501 = vmatpush1.bf16.msra.mxu0 %v471
      %502 = vmatprep.subr.bf16.mxu0 %v470
      %503 = vmatpush1.bf16.msra.mxu0 %v469
      %504 = vmatprep.subr.bf16.mxu0 0
      %505 = vmatpush2.bf16.msra.mxu0 0
      %506 = vmatprep.subr.bf16.mxu0 0
      %507 = vmatpush2.bf16.msra.mxu0 0
      %508 = vmatprep.subr.bf16.mxu0 0
      %509 = vmatpush2.bf16.msra.mxu0 0
      %510 = vmatprep.subr.bf16.mxu0 0
      %511 = vmatpush2.bf16.msra.mxu0 0
      %512 = vmatprep.subr.bf16.mxu0 0
      %513 = vmatpush2.bf16.msra.mxu0 0
      %514 = vmatprep.subr.bf16.mxu0 0
      %515 = vmatpush2.bf16.msra.mxu0 0
      %516 = vmatprep.subr.bf16.mxu0 0
      %517 = vmatpush2.bf16.msra.mxu0 0
      %518 = vmatprep.subr.bf16.mxu0 0
      %519 = vmatpush2.bf16.msra.mxu0 0
      %520 = vmatprep.mubr.bf16.mxu0 0
      %521 = vmatmul.mubr.bf16.gmra.mxu0 %v486
      %v522 = vpop.f32.mrf.mxu0
      %v523 = vadd.f32 0.0, %v522
      %v524 = vpop.f32.mrf.mxu0
      %v525 = vadd.f32 0.0, %v524
      %v526 = vpop.f32.mrf.mxu0
      %v527 = vadd.f32 0.0, %v526
      %v528 = vpop.f32.mrf.mxu0
      %v529 = vadd.f32 0.0, %v528
      %530 = vdwg.mxu0
      %v531 = vadd.f32 %v421, %v523
      %v532 = vadd.f32 %v423, %v525
      %v533 = vadd.f32 %v425, %v527
      %v534 = vadd.f32 %v427, %v529
      %v535 = vld [vmem:[%s2] sm:$0x3]
      %v537 = vlaneseq
      %v538 = vshrl.u32 %v537, 7
      %v539 = vsub.s32 0, %v538
      %v540 = vrot.slane %v535, %v539
      %v541 = vlaneseq
      %v542 = vshrl.u32 %v541, 7
      %v543 = vsub.s32 1, %v542
      %v544 = vrot.slane %v535, %v543
      %v547 = vadd.f32 %v531, %v540
      %v548 = vadd.f32 %v532, %v544
      %v549 = vadd.f32 %v533, %v540
      %v550 = vadd.f32 %v534, %v544
      %v551 = vmax.f32 %v547, 0.0
      %v552 = vmax.f32 %v548, 0.0
      %v553 = vmax.f32 %v549, 0.0
      %v554 = vmax.f32 %v550, 0.0
      %v555 = vpack.c.bf16 %v553, %v551
      %v556 = vpack.c.bf16 %v554, %v552
      %v559 = vunpack.c.l.b16 %v555
      %v560 = vunpack.c.l.b16 %v556
      %v561 = vunpack.c.h.b16 %v555
      %v562 = vunpack.c.h.b16 %v556
      %v563 = vpack.c.b16 %v560, %v559
      %v564 = vpack.c.b16 %v562, %v561
      %567 = vst [vmem:[%s170] sm:$0xff] %v563
      %568 = vst [vmem:[%s170 + $0x8] sm:$0xff] %v564
      %p569 = scmp.lt.s32.totalorder %s14, 1
      %s570 = scalar_select %p569, %s14, 1
      %s571 = smul.addr %s570, 4
      %s572 = smul.addr %s571, 4
      %s573 = scalar_lea.vmem %s3, %s572
      // Predicated region
      $region33: #{_upsample_chain.1} parent=31 // pred_check
        %p574 = pneg %p100
      $region34: #{_upsample_chain.1} parent=31 // pred_check_branch
        %576 = sbr.rel (%p574) target = $region36
      $region35: #{_upsample_chain.1} parent=31 // pred_region
        _
      $region36: #{_upsample_chain.1} parent=31 // pred_fallthru
        _
    $region32: #{_upsample_chain.1} parent=5 // pred_fallthru
      _
    %p577 = scmp.le.s32.totalorder 2, %s9
    // Predicated region
    $region37: #{_upsample_chain.1} parent=5 // pred_check
      %p578 = pneg %p577
    $region38: #{_upsample_chain.1} parent=5 // pred_check_branch
      %580 = sbr.rel (%p578) target = $region40
    $region39: #{_upsample_chain.1} parent=5 // pred_region
      %s581 = ssub.s32 %s9, 2
      // Predicated region
      $region41: #{_upsample_chain.1} parent=39 // pred_check
        %p582 = pneg %p106
      $region42: #{_upsample_chain.1} parent=39 // pred_check_branch
        %584 = sbr.rel (%p582) target = $region44
      $region43: #{_upsample_chain.1} parent=39 // pred_region
        %p585 = scmp.lt.s32.totalorder %s15, 1
        %s586 = scalar_select %p585, %s15, 1
        %s587 = smul.addr %s586, 4
        %s588 = smul.addr %s587, 4
        %s589 = scalar_lea.vmem %s3, %s588
      $region44: #{_upsample_chain.1} parent=39 // pred_fallthru
        _
    $region40: #{_upsample_chain.1} parent=5 // pred_fallthru
      _
  $region6: #{_upsample_chain.1} parent=0 // loop_footer
    %s13 = sadd.s32 1, %s9
  $region7: #{_upsample_chain.1} parent=0 // loop_footer_branch
    %8 = sbr.rel target = $region3
  $region8: #{_upsample_chain.1} parent=0 // loop_exit
    _

</llo_original>
